<compile_context>
chip_gen: v6e
topology: v6e:2x2x1
jax: 0.10.0
libtpu: 0.0.40
codegen_flags: <defaults>
</compile_context>

<pallas_src>
import math
from functools import partial

import jax
import jax.numpy as jnp
from jax.experimental import pallas as pl
from jax.experimental.pallas import tpu as pltpu

_INV_SQRT2 = 1.0 / math.sqrt(2.0)


def _round_up(x, m):
    return (x + m - 1) // m * m


def _ffn_kernel(x_ref, gamma_ref, w1_ref, w2_ref, o_ref, y_ref, acc_ref, *, eps_sq):
    """Grid = (M tiles, Di tiles).  j (Di) is the reduction axis for W2."""
    j = pl.program_id(1)

    # --- RMSNorm, computed once per row-tile (j == 0) and cached in VMEM ---
    @pl.when(j == 0)
    def _():
        x = x_ref[...].astype(jnp.float32)                       # (TM, Dp)
        sq = jnp.sum(x * x, axis=-1, keepdims=True)              # (TM, 1)
        # 1/max(||x||, eps) == rsqrt(max(||x||^2, eps^2)); rsqrt -> EUP slot.
        inv = jax.lax.rsqrt(jnp.maximum(sq, eps_sq))
        gamma = gamma_ref[...].astype(jnp.float32)               # (1, Dp), scale folded in
        y_ref[...] = (x * inv * gamma).astype(y_ref.dtype)
        acc_ref[...] = jnp.zeros_like(acc_ref)

    # --- Linear(dim -> dim_inner) tile, GELU, Linear(dim_inner -> dim) tile ---
    h = jnp.dot(y_ref[...], w1_ref[...],
                preferred_element_type=jnp.float32)              # (TM, Td) f32
    g = 0.5 * h * (1.0 + jax.lax.erf(h * _INV_SQRT2))            # exact GELU
    acc_ref[...] += jnp.dot(g.astype(w2_ref.dtype), w2_ref[...],
                            preferred_element_type=jnp.float32)  # (TM, Dp) f32

    @pl.when(j == pl.num_programs(1) - 1)
    def _():
        o_ref[...] = acc_ref[...].astype(o_ref.dtype)


def feedforward_pallas(x, gamma, w1, w2, *,
                       block_m_max=256, block_di_max=512, compute_dtype=None):
    """x: (B, S, D); gamma: (D,); w1: (D, Di); w2: (Di, D)."""
    B, S, D = x.shape
    Din, Di = w1.shape
    assert Din == D and w2.shape == (Di, D)

    out_dtype = x.dtype
    cd = compute_dtype if compute_dtype is not None else x.dtype
    cd_sz = jnp.dtype(cd).itemsize
    out_sz = jnp.dtype(out_dtype).itemsize

    # --- tile sizes (multiples of 8 / 128), pad instead of assert ---
    M = B * S
    block_m = min(block_m_max, _round_up(M, 8))
    Mp = _round_up(M, block_m)
    Dp = _round_up(D, 128)
    block_di = min(block_di_max, _round_up(Di, 128))
    Dip = _round_up(_round_up(Di, 128), block_di)

    # Fold the RMSNorm sqrt(dim) scale into gamma once; zero-pad everything to
    # lane-dense shapes (zero padding is exact: padded x/gamma cols contribute
    # nothing to the norm, padded W1 cols give GELU(0)=0, padded W2 rows/cols
    # contribute nothing to the sliced output).
    gamma2 = (gamma.astype(jnp.float32) * (float(D) ** 0.5)).reshape(1, D)

    x2 = jnp.pad(x.reshape(M, D).astype(cd), ((0, Mp - M), (0, Dp - D)))
    gamma2 = jnp.pad(gamma2, ((0, 0), (0, Dp - D))).astype(cd)
    w1p = jnp.pad(w1.astype(cd), ((0, Dp - D), (0, Dip - Di)))
    w2p = jnp.pad(w2.astype(cd), ((0, Dip - Di), (0, Dp - D)))

    grid = (Mp // block_m, Dip // block_di)

    # --- VMEM budget (double-buffered tiles + scratch), with headroom ---
    vmem_need = (
        2 * block_m * Dp * cd_sz            # x tiles
        + 2 * block_m * Dp * out_sz         # out tiles
        + 2 * Dp * block_di * cd_sz         # W1 tiles
        + 2 * block_di * Dp * cd_sz         # W2 tiles
        + 2 * Dp * cd_sz                    # gamma
        + block_m * Dp * cd_sz              # y scratch
        + block_m * Dp * 4                  # f32 accumulator
        + 2 * block_m * block_di * 4        # h / g live intermediates
    )
    vmem_limit = int(min(max(2 * vmem_need, 32 * 2**20), 48 * 2**20))

    cost = pl.CostEstimate(
        flops=4 * M * D * Di,                       # two matmuls
        transcendentals=M * Di + M,                 # erf + rsqrt
        bytes_accessed=(M * D + D * Di + Di * D + D) * cd_sz + M * D * out_sz,
    )

    out = pl.pallas_call(
        partial(_ffn_kernel, eps_sq=1e-24),         # eps^2, eps = 1e-12 (F.normalize)
        out_shape=jax.ShapeDtypeStruct((Mp, Dp), out_dtype),
        grid=grid,
        in_specs=[
            pl.BlockSpec((block_m, Dp), lambda i, j: (i, 0)),     # activations
            pl.BlockSpec((1, Dp), lambda i, j: (0, 0)),           # gamma (scale folded)
            pl.BlockSpec((Dp, block_di), lambda i, j: (0, j)),    # W1 tile
            pl.BlockSpec((block_di, Dp), lambda i, j: (j, 0)),    # W2 tile
        ],
        out_specs=pl.BlockSpec((block_m, Dp), lambda i, j: (i, 0)),
        scratch_shapes=[
            pltpu.VMEM((block_m, Dp), cd),           # cached normalized activations
            pltpu.VMEM((block_m, Dp), jnp.float32),  # f32 output accumulator
        ],
        compiler_params=pltpu.CompilerParams(
            dimension_semantics=("parallel", "arbitrary"),
            vmem_limit_bytes=vmem_limit,
        ),
        cost_estimate=cost,
    )(x2, gamma2, w1p, w2p)

    return out[:M, :D].reshape(B, S, D)


def feedforward_ref(x, gamma, w1, w2):
    """Pure-JAX reference mirroring the PyTorch FeedForward module."""
    D = x.shape[-1]
    l2 = jnp.sqrt(jnp.sum(x * x, axis=-1, keepdims=True))
    y = x / jnp.maximum(l2, 1e-12) * (D ** 0.5) * gamma
    h = y @ w1
    g = 0.5 * h * (1.0 + jax.lax.erf(h / jnp.sqrt(2.0)))
    return g @ w2


if __name__ == "__main__":
    # Small shapes consistent with the module: dim=32, mult=4 -> dim_inner=128
    B, S, D, MULT = 2, 8, 32, 4
    Di = D * MULT

    key = jax.random.PRNGKey(0)
    kx, kw1, kw2 = jax.random.split(key, 3)

    x = jax.random.normal(kx, (B, S, D), dtype=jnp.float32)
    gamma = jnp.ones((D,), dtype=jnp.float32)          # nn.Parameter(torch.ones(dim))
    # nn.Linear(bias=False) weights, stored as (in, out) for the kernel.
    w1 = jax.random.normal(kw1, (D, Di), dtype=jnp.float32) * (1.0 / math.sqrt(D))
    w2 = jax.random.normal(kw2, (Di, D), dtype=jnp.float32) * (1.0 / math.sqrt(Di))

    ref = feedforward_ref(x, gamma, w1, w2)

    # f32 compute path (exact vs reference)
    out_f32 = jax.block_until_ready(feedforward_pallas(x, gamma, w1, w2))
    assert out_f32.shape == (B, S, D)
    assert jnp.allclose(out_f32, ref, atol=1e-4, rtol=1e-4), "f32 mismatch vs reference"

    # bf16 MXU path with f32 accumulation (looser tolerance, per perf feedback)
    out_bf16 = jax.block_until_ready(
        feedforward_pallas(x, gamma, w1, w2, compute_dtype=jnp.bfloat16))
    assert out_bf16.shape == (B, S, D)
    assert jnp.allclose(out_bf16, ref, atol=6e-2, rtol=6e-2), "bf16 mismatch vs reference"

    print("KERNEL_OK")
</pallas_src>

<mosaic_0001>
module attributes {stable_mosaic.version = 11 : i64} {
  func.func @_ffn_kernel(%arg0: i32, %arg1: i32, %arg2: memref<16x128xf32, #tpu.memory_space<vmem>>, %arg3: memref<1x128xf32, #tpu.memory_space<vmem>>, %arg4: memref<128x128xf32, #tpu.memory_space<vmem>>, %arg5: memref<128x128xf32, #tpu.memory_space<vmem>>, %arg6: memref<16x128xf32, #tpu.memory_space<vmem>>, %arg7: memref<16x128xf32, #tpu.memory_space<vmem>>, %arg8: memref<16x128xf32, #tpu.memory_space<vmem>>) attributes {dimension_semantics = [#tpu.dimension_semantics<parallel>, #tpu.dimension_semantics<arbitrary>], iteration_bounds = array<i64: 1, 1>, scalar_prefetch = 0 : i64, scratch_operands = 2 : i64, tpu.core_type = #tpu.core_type<tc>, window_params = [{transform_indices = @transform_0, window_bounds = array<i64: 16, 128>}, {pipeline_mode = #tpu.pipeline_mode<synchronous>, transform_indices = @transform_1, window_bounds = array<i64: 1, 128>}, {transform_indices = @transform_2, window_bounds = array<i64: 128, 128>}, {transform_indices = @transform_3, window_bounds = array<i64: 128, 128>}, {transform_indices = @transform_4, window_bounds = array<i64: 16, 128>}]} {
    %c0_i32 = arith.constant 0 : i32
    %0 = arith.cmpi eq, %arg1, %c0_i32 : i32
    %1 = arith.extui %0 : i1 to i32
    %c0_i32_0 = arith.constant 0 : i32
    %2 = arith.cmpi ne, %1, %c0_i32_0 : i32
    scf.if %2 {
      %c0_16 = arith.constant 0 : index
      %c0_17 = arith.constant 0 : index
      %22 = vector.load %arg2[%c0_16, %c0_17] : memref<16x128xf32, #tpu.memory_space<vmem>>, vector<16x128xf32>
      %23 = arith.mulf %22, %22 : vector<16x128xf32>
      %cst_18 = arith.constant dense<0.000000e+00> : vector<16xf32>
      %24 = vector.multi_reduction <add>, %23, %cst_18 [1] : vector<16x128xf32> to vector<16xf32>
      %25 = vector.shape_cast %24 : vector<16xf32> to vector<16x1xf32>
      %cst_19 = arith.constant 1.000000e-24 : f32
      %26 = vector.broadcast %cst_19 : f32 to vector<16x1xf32>
      %27 = arith.maximumf %25, %26 : vector<16x1xf32>
      %28 = math.rsqrt %27 : vector<16x1xf32>
      %c0_20 = arith.constant 0 : index
      %c0_21 = arith.constant 0 : index
      %29 = vector.load %arg3[%c0_20, %c0_21] : memref<1x128xf32, #tpu.memory_space<vmem>>, vector<1x128xf32>
      %30 = vector.broadcast %28 : vector<16x1xf32> to vector<16x128xf32>
      %31 = arith.mulf %22, %30 : vector<16x128xf32>
      %32 = vector.broadcast %29 : vector<1x128xf32> to vector<16x128xf32>
      %33 = arith.mulf %31, %32 : vector<16x128xf32>
      %c0_22 = arith.constant 0 : index
      %c0_23 = arith.constant 0 : index
      %34 = vector.load %arg7[%c0_22, %c0_23] : memref<16x128xf32, #tpu.memory_space<vmem>>, vector<16x128xf32>
      tpu.vector_store %arg7[%c0_22, %c0_23], %33 {strides = array<i32>} : memref<16x128xf32, #tpu.memory_space<vmem>>, vector<16x128xf32>,
      %cst_24 = arith.constant 0.000000e+00 : f32
      %35 = vector.broadcast %cst_24 : f32 to vector<16x128xf32>
      %c0_25 = arith.constant 0 : index
      %c0_26 = arith.constant 0 : index
      %36 = vector.load %arg8[%c0_25, %c0_26] : memref<16x128xf32, #tpu.memory_space<vmem>>, vector<16x128xf32>
      tpu.vector_store %arg8[%c0_25, %c0_26], %35 {strides = array<i32>} : memref<16x128xf32, #tpu.memory_space<vmem>>, vector<16x128xf32>,
    } else {
    }
    %c0 = arith.constant 0 : index
    %c0_1 = arith.constant 0 : index
    %3 = vector.load %arg7[%c0, %c0_1] : memref<16x128xf32, #tpu.memory_space<vmem>>, vector<16x128xf32>
    %c0_2 = arith.constant 0 : index
    %c0_3 = arith.constant 0 : index
    %4 = vector.load %arg4[%c0_2, %c0_3] : memref<128x128xf32, #tpu.memory_space<vmem>>, vector<128x128xf32>
    %cst = arith.constant dense<0.000000e+00> : vector<16x128xf32>
    %5 = tpu.matmul %3, %4, %cst {dimension_numbers = #tpu.dot_dimension_numbers<[1], [0], [0], [1], [0, 0, 1, 1], [], []>} : vector<16x128xf32>, vector<128x128xf32>, vector<16x128xf32> -> vector<16x128xf32>
    %cst_4 = arith.constant 5.000000e-01 : f32
    %6 = vector.broadcast %cst_4 : f32 to vector<16x128xf32>
    %7 = arith.mulf %6, %5 : vector<16x128xf32>
    %cst_5 = arith.constant 0.707106769 : f32
    %8 = vector.broadcast %cst_5 : f32 to vector<16x128xf32>
    %9 = arith.mulf %5, %8 : vector<16x128xf32>
    %10 = math.erf %9 : vector<16x128xf32>
    %cst_6 = arith.constant 1.000000e+00 : f32
    %11 = vector.broadcast %cst_6 : f32 to vector<16x128xf32>
    %12 = arith.addf %11, %10 : vector<16x128xf32>
    %13 = arith.mulf %7, %12 : vector<16x128xf32>
    %c0_7 = arith.constant 0 : index
    %c0_8 = arith.constant 0 : index
    %14 = vector.load %arg8[%c0_7, %c0_8] : memref<16x128xf32, #tpu.memory_space<vmem>>, vector<16x128xf32>
    %c0_9 = arith.constant 0 : index
    %c0_10 = arith.constant 0 : index
    %15 = vector.load %arg5[%c0_9, %c0_10] : memref<128x128xf32, #tpu.memory_space<vmem>>, vector<128x128xf32>
    %cst_11 = arith.constant dense<0.000000e+00> : vector<16x128xf32>
    %16 = tpu.matmul %13, %15, %cst_11 {dimension_numbers = #tpu.dot_dimension_numbers<[1], [0], [0], [1], [0, 0, 1, 1], [], []>} : vector<16x128xf32>, vector<128x128xf32>, vector<16x128xf32> -> vector<16x128xf32>
    %17 = arith.addf %14, %16 : vector<16x128xf32>
    %c0_12 = arith.constant 0 : index
    %c0_13 = arith.constant 0 : index
    %18 = vector.load %arg8[%c0_12, %c0_13] : memref<16x128xf32, #tpu.memory_space<vmem>>, vector<16x128xf32>
    tpu.vector_store %arg8[%c0_12, %c0_13], %17 {strides = array<i32>} : memref<16x128xf32, #tpu.memory_space<vmem>>, vector<16x128xf32>,
    %c0_i32_14 = arith.constant 0 : i32
    %19 = arith.cmpi eq, %arg1, %c0_i32_14 : i32
    %20 = arith.extui %19 : i1 to i32
    %c0_i32_15 = arith.constant 0 : i32
    %21 = arith.cmpi ne, %20, %c0_i32_15 : i32
    scf.if %21 {
      %c0_16 = arith.constant 0 : index
      %c0_17 = arith.constant 0 : index
      %22 = vector.load %arg8[%c0_16, %c0_17] : memref<16x128xf32, #tpu.memory_space<vmem>>, vector<16x128xf32>
      %c0_18 = arith.constant 0 : index
      %c0_19 = arith.constant 0 : index
      %23 = vector.load %arg6[%c0_18, %c0_19] : memref<16x128xf32, #tpu.memory_space<vmem>>, vector<16x128xf32>
      tpu.vector_store %arg6[%c0_18, %c0_19], %22 {strides = array<i32>} : memref<16x128xf32, #tpu.memory_space<vmem>>, vector<16x128xf32>,
    } else {
    }
    return
  }
  func.func @transform_0(%arg0: i32, %arg1: i32) -> (i32, i32) {
    %c0_i32 = arith.constant 0 : i32
    %c0_i32_0 = arith.constant 0 : i32
    return %arg0, %c0_i32 : i32, i32
  }
  func.func @transform_1(%arg0: i32, %arg1: i32) -> (i32, i32) {
    %c0_i32 = arith.constant 0 : i32
    %c0_i32_0 = arith.constant 0 : i32
    %c0_i32_1 = arith.constant 0 : i32
    return %c0_i32, %c0_i32_0 : i32, i32
  }
  func.func @transform_2(%arg0: i32, %arg1: i32) -> (i32, i32) {
    %c0_i32 = arith.constant 0 : i32
    %c0_i32_0 = arith.constant 0 : i32
    return %c0_i32, %arg1 : i32, i32
  }
  func.func @transform_3(%arg0: i32, %arg1: i32) -> (i32, i32) {
    %c0_i32 = arith.constant 0 : i32
    %c0_i32_0 = arith.constant 0 : i32
    return %arg1, %c0_i32 : i32, i32
  }
  func.func @transform_4(%arg0: i32, %arg1: i32) -> (i32, i32) {
    %c0_i32 = arith.constant 0 : i32
    %c0_i32_0 = arith.constant 0 : i32
    return %arg0, %c0_i32 : i32, i32
  }
}

</mosaic_0001>

<llo_original>
// kernel: tpu_custom_call.1
$region0: #{tpu_custom_call.1}
  #allocation0 [shape = 'u32[]', space=smem, size = 0x4, offset = 0x4, fixed_abs, tag = 'smem constant byte address 0x4 - core index']
  #allocation1 [shape = 'u32[144,128]{1,0:T(1,128)}', space=vmem, size = 0x12000, scoped, tag = 'internal scratch']
  #allocation2 [shape = 'f32[16,128]{1,0:T(8,128)}', space=vmem, size = 0x2000, scoped, tag = 'scratch operand']
  #allocation3 [shape = 'f32[16,128]{1,0:T(8,128)}', space=vmem, size = 0x2000, scoped, tag = 'scratch operand']
  %s0 = inlined_call_operand.hbm [shape: f32[16,128], index: 0, kind: input, shape index: {}]
  %s1 = inlined_call_operand.vmem [shape: f32[1,128], index: 1, kind: input, shape index: {}]
  %s2 = inlined_call_operand.hbm [shape: f32[128,128], index: 2, kind: input, shape index: {}]
  %s3 = inlined_call_operand.hbm [shape: f32[128,128], index: 3, kind: input, shape index: {}]
  %s4 = inlined_call_operand.hbm [shape: f32[16,128], index: 4, kind: output, shape index: {}]
  %s5 = sld [smem:[#allocation0]]
  $region46: #{tpu_custom_call.1} parent=0
    _
  %s7 = ssub.s32 1, %s5
  %s8 = scalar_select 0, %s7, %s5
  $region1: #{tpu_custom_call.1} parent=0
    #allocation4 [shape = 'u8[8192]{0}', space=vmem, size = 0x2000, scoped, tag = 'input window, operand 0, single buffered']
    #allocation5 [shape = 's32[1]{0}', space=sflag, size = 0x4, scoped, tag = 'scoped memory for tpu_custom_call.1']
    #allocation6 [shape = 's32[1]{0}', space=sflag, size = 0x4, scoped, tag = 'scoped memory for tpu_custom_call.1']
    #allocation7 [shape = 'u8[65536]{0}', space=vmem, size = 0x10000, scoped, tag = 'input window, operand 2, single buffered']
    #allocation8 [shape = 's32[1]{0}', space=sflag, size = 0x4, scoped, tag = 'scoped memory for tpu_custom_call.1']
    #allocation9 [shape = 'u8[65536]{0}', space=vmem, size = 0x10000, scoped, tag = 'input window, operand 3, single buffered']
    #allocation10 [shape = 'u8[8192]{0}', space=vmem, size = 0x2000, scoped, tag = 'output window, operand 0, single buffered']
    %9 = vsyncpa [#allocation5], 0
    %10 = vsyncpa [#allocation8], 0
    %11 = vsyncpa [#allocation6], 0
    // Predicated region
    $region2: #{tpu_custom_call.1} parent=1 // pred_check
      _
    $region3: #{tpu_custom_call.1} parent=1 // pred_check_branch
      %13 = sbr.rel (0) target = $region5
    $region4: #{tpu_custom_call.1} parent=1 // pred_region
      %s15 = ssub.s32 256, 256
      %16 = vsyncadd [#allocation5], %s15
      %s17 = sshll.u32 [#allocation4], 4
      %s18 = int_to_ptr.vmem [resolvable:$true] %s17
      %23 = dma.hbm_to_vmem [thread:$0]  %s0, 256, %s18, [#allocation5], 128, 128, 8
    $region5: #{tpu_custom_call.1} parent=1 // pred_fallthru
      _
    // Predicated region
    $region6: #{tpu_custom_call.1} parent=1 // pred_check
      _
    $region7: #{tpu_custom_call.1} parent=1 // pred_check_branch
      %25 = sbr.rel (0) target = $region9
    $region8: #{tpu_custom_call.1} parent=1 // pred_region
      _
    $region9: #{tpu_custom_call.1} parent=1 // pred_fallthru
      _
    // Predicated region
    $region10: #{tpu_custom_call.1} parent=1 // pred_check
      _
    $region11: #{tpu_custom_call.1} parent=1 // pred_check_branch
      %27 = sbr.rel (0) target = $region13
    $region12: #{tpu_custom_call.1} parent=1 // pred_region
      %s29 = ssub.s32 2048, 2048
      %30 = vsyncadd [#allocation8], %s29
      %s31 = sshll.u32 [#allocation7], 4
      %s32 = int_to_ptr.vmem [resolvable:$true] %s31
      %37 = dma.hbm_to_vmem [thread:$0]  %s2, 2048, %s32, [#allocation8], 128, 128, 8
    $region13: #{tpu_custom_call.1} parent=1 // pred_fallthru
      _
    // Predicated region
    $region14: #{tpu_custom_call.1} parent=1 // pred_check
      _
    $region15: #{tpu_custom_call.1} parent=1 // pred_check_branch
      %39 = sbr.rel (0) target = $region17
    $region16: #{tpu_custom_call.1} parent=1 // pred_region
      %s41 = ssub.s32 2048, 2048
      %42 = vsyncadd [#allocation8], %s41
      %s43 = sshll.u32 [#allocation9], 4
      %s44 = int_to_ptr.vmem [resolvable:$true] %s43
      %49 = dma.hbm_to_vmem [thread:$0]  %s3, 2048, %s44, [#allocation8], 128, 128, 8
    $region17: #{tpu_custom_call.1} parent=1 // pred_fallthru
      _
    // Predicated region
    $region18: #{tpu_custom_call.1} parent=1 // pred_check
      _
    $region19: #{tpu_custom_call.1} parent=1 // pred_check_branch
      %51 = sbr.rel (0) target = $region21
    $region20: #{tpu_custom_call.1} parent=1 // pred_region
      %52 = dma.done [#allocation5], 256
    $region21: #{tpu_custom_call.1} parent=1 // pred_fallthru
      _
    // Predicated region
    $region22: #{tpu_custom_call.1} parent=1 // pred_check
      _
    $region23: #{tpu_custom_call.1} parent=1 // pred_check_branch
      %54 = sbr.rel (0) target = $region25
    $region24: #{tpu_custom_call.1} parent=1 // pred_region
      %55 = dma.done [#allocation8], 2048
    $region25: #{tpu_custom_call.1} parent=1 // pred_fallthru
      _
    // Predicated region
    $region26: #{tpu_custom_call.1} parent=1 // pred_check
      _
    $region27: #{tpu_custom_call.1} parent=1 // pred_check_branch
      %57 = sbr.rel (0) target = $region29
    $region28: #{tpu_custom_call.1} parent=1 // pred_region
      %58 = dma.done [#allocation8], 2048
    $region29: #{tpu_custom_call.1} parent=1 // pred_fallthru
      _
    %p59 = scmp.eq.s32.totalorder 0, 0
    // Predicated region
    $region30: #{tpu_custom_call.1} parent=1 // pred_check
      %p60 = pneg %p59
    $region31: #{tpu_custom_call.1} parent=1 // pred_check_branch
      %62 = sbr.rel (%p60) target = $region33
    $region32: #{tpu_custom_call.1} parent=1 // pred_region
      %v63 = vld [vmem:[#allocation4] sm:$0xff]
      %v64 = vld [vmem:[#allocation4 + $0x8] sm:$0xff]
      %v65 = vmul.f32 %v63, %v63
      %v66 = vmul.f32 %v64, %v64
      %67 = vadd.xlane.f32.xlu0 %v65
      %v68 = vpop.xlane.xlu0 %67
      %69 = vadd.xlane.f32.xlu0 %v66
      %v70 = vpop.xlane.xlu0 %69
      %v71 = vmax.f32 %v68, 1e-24
      %v72 = vmax.f32 %v70, 1e-24
      %v73 = vrsqrt.pop %v71
      %v74 = vrsqrt.pop %v72
      %v75 = vld [vmem:[%s1] sm:$0x1]
      %v76 = vmul.f32 %v63, %v73
      %v77 = vmul.f32 %v64, %v74
      %v79 = vlaneseq
      %v80 = vshrl.u32 %v79, 7
      %v81 = vsub.s32 0, %v80
      %v82 = vrot.slane %v75, %v81
      %v84 = vmul.f32 %v76, %v82
      %v85 = vmul.f32 %v77, %v82
      %86 = vst [vmem:[#allocation2] sm:$0xff] %v84
      %87 = vst [vmem:[#allocation2 + $0x8] sm:$0xff] %v85
      %88 = vst [vmem:[#allocation3] sm:$0xff] 0.0
      %89 = vst [vmem:[#allocation3 + $0x8] sm:$0xff] 0.0
    $region33: #{tpu_custom_call.1} parent=1 // pred_fallthru
      _
    %v90 = vld [vmem:[#allocation2] sm:$0xff]
    %v91 = vld [vmem:[#allocation2 + $0x8] sm:$0xff]
    %v92 = vld [vmem:[#allocation7] sm:$0xff]
    %v93 = vld [vmem:[#allocation7 + $0x8] sm:$0xff]
    %v94 = vld [vmem:[#allocation7 + $0x10] sm:$0xff]
    %v95 = vld [vmem:[#allocation7 + $0x18] sm:$0xff]
    %v96 = vld [vmem:[#allocation7 + $0x20] sm:$0xff]
    %v97 = vld [vmem:[#allocation7 + $0x28] sm:$0xff]
    %v98 = vld [vmem:[#allocation7 + $0x30] sm:$0xff]
    %v99 = vld [vmem:[#allocation7 + $0x38] sm:$0xff]
    %v100 = vld [vmem:[#allocation7 + $0x40] sm:$0xff]
    %v101 = vld [vmem:[#allocation7 + $0x48] sm:$0xff]
    %v102 = vld [vmem:[#allocation7 + $0x50] sm:$0xff]
    %v103 = vld [vmem:[#allocation7 + $0x58] sm:$0xff]
    %v104 = vld [vmem:[#allocation7 + $0x60] sm:$0xff]
    %v105 = vld [vmem:[#allocation7 + $0x68] sm:$0xff]
    %v106 = vld [vmem:[#allocation7 + $0x70] sm:$0xff]
    %v107 = vld [vmem:[#allocation7 + $0x78] sm:$0xff]
    %108 = vmatprep.subr.mxu0 0.0
    %109 = vmatpush1.msra.mxu0 %v107
    %110 = vmatprep.subr.mxu0 0.0
    %111 = vmatpush1.msra.mxu0 %v106
    %112 = vmatprep.subr.mxu0 0.0
    %113 = vmatpush1.msra.mxu0 %v105
    %114 = vmatprep.subr.mxu0 0.0
    %115 = vmatpush1.msra.mxu0 %v104
    %116 = vmatprep.subr.mxu0 0.0
    %117 = vmatpush1.msra.mxu0 %v103
    %118 = vmatprep.subr.mxu0 0.0
    %119 = vmatpush1.msra.mxu0 %v102
    %120 = vmatprep.subr.mxu0 0.0
    %121 = vmatpush1.msra.mxu0 %v101
    %122 = vmatprep.subr.mxu0 0.0
    %123 = vmatpush1.msra.mxu0 %v100
    %124 = vmatprep.subr.mxu0 0.0
    %125 = vmatpush1.msra.mxu0 %v99
    %126 = vmatprep.subr.mxu0 0.0
    %127 = vmatpush1.msra.mxu0 %v98
    %128 = vmatprep.subr.mxu0 0.0
    %129 = vmatpush1.msra.mxu0 %v97
    %130 = vmatprep.subr.mxu0 0.0
    %131 = vmatpush1.msra.mxu0 %v96
    %132 = vmatprep.subr.mxu0 0.0
    %133 = vmatpush1.msra.mxu0 %v95
    %134 = vmatprep.subr.mxu0 0.0
    %135 = vmatpush1.msra.mxu0 %v94
    %136 = vmatprep.subr.mxu0 0.0
    %137 = vmatpush1.msra.mxu0 %v93
    %138 = vmatprep.subr.mxu0 0.0
    %139 = vmatpush1.msra.mxu0 %v92
    %140 = vmatprep.subr.mxu0 0.0
    %141 = vmatpush2.msra.mxu0 0.0
    %142 = vmatprep.subr.mxu0 0.0
    %143 = vmatpush2.msra.mxu0 0.0
    %144 = vmatprep.subr.mxu0 0.0
    %145 = vmatpush2.msra.mxu0 0.0
    %146 = vmatprep.subr.mxu0 0.0
    %147 = vmatpush2.msra.mxu0 0.0
    %148 = vmatprep.subr.mxu0 0.0
    %149 = vmatpush2.msra.mxu0 0.0
    %150 = vmatprep.subr.mxu0 0.0
    %151 = vmatpush2.msra.mxu0 0.0
    %152 = vmatprep.subr.mxu0 0.0
    %153 = vmatpush2.msra.mxu0 0.0
    %154 = vmatprep.subr.mxu0 0.0
    %155 = vmatpush2.msra.mxu0 0.0
    %156 = vmatprep.subr.mxu0 0.0
    %157 = vmatpush2.msra.mxu0 0.0
    %158 = vmatprep.subr.mxu0 0.0
    %159 = vmatpush2.msra.mxu0 0.0
    %160 = vmatprep.subr.mxu0 0.0
    %161 = vmatpush2.msra.mxu0 0.0
    %162 = vmatprep.subr.mxu0 0.0
    %163 = vmatpush2.msra.mxu0 0.0
    %164 = vmatprep.subr.mxu0 0.0
    %165 = vmatpush2.msra.mxu0 0.0
    %166 = vmatprep.subr.mxu0 0.0
    %167 = vmatpush2.msra.mxu0 0.0
    %168 = vmatprep.subr.mxu0 0.0
    %169 = vmatpush2.msra.mxu0 0.0
    %170 = vmatprep.subr.mxu0 0.0
    %171 = vmatpush2.msra.mxu0 0.0
    %172 = vmatprep.mubr.f32.mxu0 0.0
    %173 = vmatmul.mubr.f32.gmra.mxu0 %v90
    %v174 = vpop.f32.mrf.mxu0
    %v175 = vadd.f32 0.0, %v174
    %v176 = vpop.f32.mrf.mxu0
    %177 = vmatprep.mubr.f32.mxu0 0.0
    %178 = vmatmul.mubr.f32.gmra.mxu0 %v91
    %v179 = vpop.f32.mrf.mxu0
    %v180 = vadd.f32 0.0, %v179
    %v181 = vpop.f32.mrf.mxu0
    %182 = vdwg.mxu0
    %v183 = vmul.f32 %v175, 0.5
    %v184 = vmul.f32 %v180, 0.5
    %v185 = vmul.f32 %v175, 0.70710677
    %v186 = vmul.f32 %v180, 0.70710677
    %v187 = verf.f32.pop %v185
    %v188 = verf.f32.pop %v186
    %v189 = vadd.f32 %v187, 1.0
    %v190 = vadd.f32 %v188, 1.0
    %v191 = vmul.f32 %v183, %v189
    %v192 = vmul.f32 %v184, %v190
    %v193 = vld [vmem:[#allocation3] sm:$0xff]
    %v194 = vld [vmem:[#allocation3 + $0x8] sm:$0xff]
    %v195 = vld [vmem:[#allocation9] sm:$0xff]
    %v196 = vld [vmem:[#allocation9 + $0x8] sm:$0xff]
    %v197 = vld [vmem:[#allocation9 + $0x10] sm:$0xff]
    %v198 = vld [vmem:[#allocation9 + $0x18] sm:$0xff]
    %v199 = vld [vmem:[#allocation9 + $0x20] sm:$0xff]
    %v200 = vld [vmem:[#allocation9 + $0x28] sm:$0xff]
    %v201 = vld [vmem:[#allocation9 + $0x30] sm:$0xff]
    %v202 = vld [vmem:[#allocation9 + $0x38] sm:$0xff]
    %v203 = vld [vmem:[#allocation9 + $0x40] sm:$0xff]
    %v204 = vld [vmem:[#allocation9 + $0x48] sm:$0xff]
    %v205 = vld [vmem:[#allocation9 + $0x50] sm:$0xff]
    %v206 = vld [vmem:[#allocation9 + $0x58] sm:$0xff]
    %v207 = vld [vmem:[#allocation9 + $0x60] sm:$0xff]
    %v208 = vld [vmem:[#allocation9 + $0x68] sm:$0xff]
    %v209 = vld [vmem:[#allocation9 + $0x70] sm:$0xff]
    %v210 = vld [vmem:[#allocation9 + $0x78] sm:$0xff]
    %211 = vmatprep.subr.mxu0 0.0
    %212 = vmatpush1.msra.mxu0 %v210
    %213 = vmatprep.subr.mxu0 0.0
    %214 = vmatpush1.msra.mxu0 %v209
    %215 = vmatprep.subr.mxu0 0.0
    %216 = vmatpush1.msra.mxu0 %v208
    %217 = vmatprep.subr.mxu0 0.0
    %218 = vmatpush1.msra.mxu0 %v207
    %219 = vmatprep.subr.mxu0 0.0
    %220 = vmatpush1.msra.mxu0 %v206
    %221 = vmatprep.subr.mxu0 0.0
    %222 = vmatpush1.msra.mxu0 %v205
    %223 = vmatprep.subr.mxu0 0.0
    %224 = vmatpush1.msra.mxu0 %v204
    %225 = vmatprep.subr.mxu0 0.0
    %226 = vmatpush1.msra.mxu0 %v203
    %227 = vmatprep.subr.mxu0 0.0
    %228 = vmatpush1.msra.mxu0 %v202
    %229 = vmatprep.subr.mxu0 0.0
    %230 = vmatpush1.msra.mxu0 %v201
    %231 = vmatprep.subr.mxu0 0.0
    %232 = vmatpush1.msra.mxu0 %v200
    %233 = vmatprep.subr.mxu0 0.0
    %234 = vmatpush1.msra.mxu0 %v199
    %235 = vmatprep.subr.mxu0 0.0
    %236 = vmatpush1.msra.mxu0 %v198
    %237 = vmatprep.subr.mxu0 0.0
    %238 = vmatpush1.msra.mxu0 %v197
    %239 = vmatprep.subr.mxu0 0.0
    %240 = vmatpush1.msra.mxu0 %v196
    %241 = vmatprep.subr.mxu0 0.0
    %242 = vmatpush1.msra.mxu0 %v195
    %243 = vmatprep.subr.mxu0 0.0
    %244 = vmatpush2.msra.mxu0 0.0
    %245 = vmatprep.subr.mxu0 0.0
    %246 = vmatpush2.msra.mxu0 0.0
    %247 = vmatprep.subr.mxu0 0.0
    %248 = vmatpush2.msra.mxu0 0.0
    %249 = vmatprep.subr.mxu0 0.0
    %250 = vmatpush2.msra.mxu0 0.0
    %251 = vmatprep.subr.mxu0 0.0
    %252 = vmatpush2.msra.mxu0 0.0
    %253 = vmatprep.subr.mxu0 0.0
    %254 = vmatpush2.msra.mxu0 0.0
    %255 = vmatprep.subr.mxu0 0.0
    %256 = vmatpush2.msra.mxu0 0.0
    %257 = vmatprep.subr.mxu0 0.0
    %258 = vmatpush2.msra.mxu0 0.0
    %259 = vmatprep.subr.mxu0 0.0
    %260 = vmatpush2.msra.mxu0 0.0
    %261 = vmatprep.subr.mxu0 0.0
    %262 = vmatpush2.msra.mxu0 0.0
    %263 = vmatprep.subr.mxu0 0.0
    %264 = vmatpush2.msra.mxu0 0.0
    %265 = vmatprep.subr.mxu0 0.0
    %266 = vmatpush2.msra.mxu0 0.0
    %267 = vmatprep.subr.mxu0 0.0
    %268 = vmatpush2.msra.mxu0 0.0
    %269 = vmatprep.subr.mxu0 0.0
    %270 = vmatpush2.msra.mxu0 0.0
    %271 = vmatprep.subr.mxu0 0.0
    %272 = vmatpush2.msra.mxu0 0.0
    %273 = vmatprep.subr.mxu0 0.0
    %274 = vmatpush2.msra.mxu0 0.0
    %275 = vmatprep.mubr.f32.mxu0 0.0
    %276 = vmatmul.mubr.f32.gmra.mxu0 %v191
    %v277 = vpop.f32.mrf.mxu0
    %v278 = vadd.f32 0.0, %v277
    %v279 = vpop.f32.mrf.mxu0
    %280 = vmatprep.mubr.f32.mxu0 0.0
    %281 = vmatmul.mubr.f32.gmra.mxu0 %v192
    %v282 = vpop.f32.mrf.mxu0
    %v283 = vadd.f32 0.0, %v282
    %v284 = vpop.f32.mrf.mxu0
    %285 = vdwg.mxu0
    %v286 = vadd.f32 %v193, %v278
    %v287 = vadd.f32 %v194, %v283
    %288 = vst [vmem:[#allocation3] sm:$0xff] %v286
    %289 = vst [vmem:[#allocation3 + $0x8] sm:$0xff] %v287
    // Predicated region
    $region34: #{tpu_custom_call.1} parent=1 // pred_check
      %p290 = pneg %p59
    $region35: #{tpu_custom_call.1} parent=1 // pred_check_branch
      %292 = sbr.rel (%p290) target = $region37
    $region36: #{tpu_custom_call.1} parent=1 // pred_region
      %v293 = vld [vmem:[#allocation3] sm:$0xff]
      %v294 = vld [vmem:[#allocation3 + $0x8] sm:$0xff]
      %295 = vst [vmem:[#allocation10] sm:$0xff] %v293
      %296 = vst [vmem:[#allocation10 + $0x8] sm:$0xff] %v294
    $region37: #{tpu_custom_call.1} parent=1 // pred_fallthru
      _
    // Predicated region
    $region38: #{tpu_custom_call.1} parent=1 // pred_check
      _
    $region39: #{tpu_custom_call.1} parent=1 // pred_check_branch
      %298 = sbr.rel (0) target = $region41
    $region40: #{tpu_custom_call.1} parent=1 // pred_region
      %s300 = ssub.s32 256, 256
      %301 = vsyncadd [#allocation6], %s300
      %s302 = sshll.u32 [#allocation10], 4
      %s303 = int_to_ptr.vmem [resolvable:$true] %s302
      %308 = dma.vmem_to_hbm [thread:$0]  %s303, 256, %s4, [#allocation6], 128, 128, 8
    $region41: #{tpu_custom_call.1} parent=1 // pred_fallthru
      _
    // Predicated region
    $region42: #{tpu_custom_call.1} parent=1 // pred_check
      _
    $region43: #{tpu_custom_call.1} parent=1 // pred_check_branch
      %310 = sbr.rel (0) target = $region45
    $region44: #{tpu_custom_call.1} parent=1 // pred_region
      %311 = dma.done [#allocation6], 256
    $region45: #{tpu_custom_call.1} parent=1 // pred_fallthru
      _
    %312 = vsyncpa [#allocation5], 1
    %313 = vsyncpa [#allocation8], 1
    %314 = vsyncpa [#allocation6], 1

</llo_original>
